<compile_context>
chip_gen: v7x
topology: tpu7x:2x2x1
jax: 0.10.0
libtpu: 0.0.40
codegen_flags: <defaults>
</compile_context>

<pallas_src>
import functools

import jax
import jax.numpy as jnp
import numpy as np
from jax import lax
from jax.experimental import pallas as pl
from jax.experimental.pallas import tpu as pltpu

EPS = 1e-5
LANE = 128
VMEM_LIMIT = 32 * 1024 * 1024  # explicit scoped-VMEM budget (safe on v5e/v6e/v7x)


# ---------------------------------------------------------------------------
# helpers
# ---------------------------------------------------------------------------
def _act(y, non_linear):
    if non_linear == "RE":
        return jnp.maximum(y, 0.0)
    # HardSwish: x * relu6(x + 3) / 6
    return y * jnp.clip(y + 3.0, 0.0, 6.0) * (1.0 / 6.0)


def _round_up(n, m):
    return ((n + m - 1) // m) * m


def _pad_last(a, target):
    p = target - a.shape[-1]
    if p == 0:
        return a
    return jnp.pad(a, [(0, 0)] * (a.ndim - 1) + [(0, p)])


def _pick_tile(total, cands=(1024, 512, 256, 128, 64, 32, 16, 8)):
    # Largest (8,128)-friendly row tile that gives >= 2 grid steps along HW.
    for c in cands:
        if total % c == 0 and total // c >= 2:
            return c
    return total


# ---------------------------------------------------------------------------
# Pallas kernels
# ---------------------------------------------------------------------------
def _conv1_kernel(x_ref, w_ref, b_ref, o_ref, *, non_linear):
    # x_ref: (1, TM, Cin) bf16   w_ref: (Cin, Ep) bf16   b_ref: (1, Ep) f32
    # o_ref: (1, TM, Ep) bf16    (Ep is a multiple of 128 -> lane-dense stores)
    y = jnp.dot(x_ref[0], w_ref[...], preferred_element_type=jnp.float32)
    y = y + b_ref[...]
    o_ref[0] = _act(y, non_linear).astype(o_ref.dtype)


def _dw_pw_kernel(p_ref, wdw_ref, b2_ref, w3_ref, b3_ref, o_ref, *,
                  k, Ho, Wo, non_linear):
    # p_ref : (1, 4, Hp2, Wp2, Ep) bf16  stride-2 parity planes of padded h1
    # wdw_ref:(K2, Ep) f32               BN-folded depthwise weights (flat)
    # b2_ref: (1, Ep) f32
    # w3_ref: (Ep, Op) bf16              BN-folded 1x1 conv weights
    # b3_ref: (1, Op) f32
    # o_ref : (1, Ho*Wo, Op) f32
    wdw = wdw_ref[...]                                          # (K2, Ep)
    acc = None
    for dy in range(k):                                         # static unroll
        qy, ry = divmod(dy, 2)
        for dx in range(k):
            qx, rx = divmod(dx, 2)
            # contiguous (Ho, Wo, Ep) window of the (ry, rx) parity plane
            win = p_ref[0, 2 * ry + rx, qy:qy + Ho, qx:qx + Wo, :]
            term = win.astype(jnp.float32) * wdw[dy * k + dx]
            acc = term if acc is None else acc + term
    h = _act(acc + b2_ref[...], non_linear)                     # (Ho, Wo, Ep) f32
    h = h.astype(jnp.bfloat16).reshape(Ho * Wo, -1)             # (HoWo, Ep) bf16
    o_ref[0] = (jnp.dot(h, w3_ref[...], preferred_element_type=jnp.float32)
                + b3_ref[...])


# ---------------------------------------------------------------------------
# parameter init (matches the PyTorch module's shapes)
# ---------------------------------------------------------------------------
def init_params(key, in_channels, out_channels, exp_size, kernel_size):
    ks = jax.random.split(key, 16)

    def u(k_, shape, lo=-0.5, hi=0.5):
        return jax.random.uniform(k_, shape, jnp.float32, lo, hi)

    return dict(
        w1=u(ks[0], (exp_size, in_channels, 1, 1)), b1=u(ks[1], (exp_size,)),
        g1=u(ks[2], (exp_size,), 0.5, 1.5), be1=u(ks[3], (exp_size,)),
        m1=u(ks[4], (exp_size,)), v1=u(ks[5], (exp_size,), 0.5, 1.5),
        w2=u(ks[6], (exp_size, 1, kernel_size, kernel_size)), b2=u(ks[7], (exp_size,)),
        g2=u(ks[8], (exp_size,), 0.5, 1.5), be2=u(ks[9], (exp_size,)),
        m2=u(ks[10], (exp_size,)), v2=u(ks[11], (exp_size,), 0.5, 1.5),
        w3=u(ks[12], (out_channels, exp_size, 1, 1)), b3=u(ks[13], (out_channels,)),
        g3=u(ks[14], (out_channels,), 0.5, 1.5), be3=u(ks[15], (out_channels,)),
        m3=jnp.zeros((out_channels,), jnp.float32),
        v3=jnp.ones((out_channels,), jnp.float32),
    )


# ---------------------------------------------------------------------------
# DownsampleUnit forward (Pallas)
# ---------------------------------------------------------------------------
def downsample_unit(x_nchw, params, kernel_size, non_linear):
    k = kernel_size
    pad = 1 if k == 3 else 2                         # get_padding
    N, Cin, H, W = x_nchw.shape
    E = params["w1"].shape[0]
    Cout = params["w3"].shape[0]
    Ho = (H + 2 * pad - k) // 2 + 1
    Wo = (W + 2 * pad - k) // 2 + 1
    HW, HoWo, K2 = H * W, Ho * Wo, k * k
    Ep, Op = _round_up(E, LANE), _round_up(Cout, LANE)

    # ---- fold BN into conv weights/biases; pad channels to 128 lanes --------
    def fold(g, be, m, v):
        s = g / jnp.sqrt(v + EPS)
        return s, (lambda bias: (bias - m) * s + be)

    s1, sh1 = fold(params["g1"], params["be1"], params["m1"], params["v1"])
    w1_eff = _pad_last(params["w1"][:, :, 0, 0].T * s1[None, :], Ep)   # (Cin, Ep)
    b1_eff = _pad_last(sh1(params["b1"])[None, :], Ep)                 # (1, Ep)

    s2, sh2 = fold(params["g2"], params["be2"], params["m2"], params["v2"])
    wdw = jnp.transpose(params["w2"][:, 0, :, :], (1, 2, 0)).reshape(K2, E)
    wdw_eff = _pad_last(wdw * s2[None, :], Ep)                         # (K2, Ep)
    b2_eff = _pad_last(sh2(params["b2"])[None, :], Ep)                 # (1, Ep)

    s3, sh3 = fold(params["g3"], params["be3"], params["m3"], params["v3"])
    w3_eff = params["w3"][:, :, 0, 0].T * s3[None, :]                  # (E, Cout)
    w3_eff = jnp.pad(w3_eff, ((0, Ep - E), (0, Op - Cout)))            # (Ep, Op)
    b3_eff = _pad_last(sh3(params["b3"])[None, :], Op)                 # (1, Op)

    w1_bf = w1_eff.astype(jnp.bfloat16)
    w3_bf = w3_eff.astype(jnp.bfloat16)

    # ---- stage 1: 1x1 conv + BN + act (bf16 MXU, lane-dense Ep output) ------
    x2d = jnp.transpose(x_nchw, (0, 2, 3, 1)).reshape(N, HW, Cin).astype(jnp.bfloat16)
    TM = _pick_tile(HW)
    h1 = pl.pallas_call(
        functools.partial(_conv1_kernel, non_linear=non_linear),
        out_shape=jax.ShapeDtypeStruct((N, HW, Ep), jnp.bfloat16),
        grid=(N, HW // TM),
        in_specs=[
            pl.BlockSpec((1, TM, Cin), lambda n, m: (n, m, 0)),
            pl.BlockSpec((Cin, Ep), lambda n, m: (0, 0)),
            pl.BlockSpec((1, Ep), lambda n, m: (0, 0)),
        ],
        out_specs=pl.BlockSpec((1, TM, Ep), lambda n, m: (n, m, 0)),
        compiler_params=pltpu.CompilerParams(
            dimension_semantics=("parallel", "parallel"),
            vmem_limit_bytes=VMEM_LIMIT),
    )(x2d, w1_bf, b1_eff)

    # ---- glue: spatial zero-pad + stride-2 parity-plane split (bf16) --------
    # planes[n, 2*ry+rx, i, j, :] == padded_h1[n, 2*i+ry, 2*j+rx, :]
    # total size == padded h1 (NOT the K2-x patches blow-up of the old code).
    Hp, Wp = H + 2 * pad, W + 2 * pad
    Hpe, Wpe = Hp + (Hp & 1), Wp + (Wp & 1)          # even so the parity split is exact
    Hp2, Wp2 = Hpe // 2, Wpe // 2
    h1 = h1.reshape(N, H, W, Ep)
    h1p = jnp.pad(h1, ((0, 0), (pad, Hpe - H - pad), (pad, Wpe - W - pad), (0, 0)))
    planes = h1p.reshape(N, Hp2, 2, Wp2, 2, Ep)
    planes = jnp.transpose(planes, (0, 2, 4, 1, 3, 5)).reshape(N, 4, Hp2, Wp2, Ep)

    # ---- stage 2+3: depthwise conv + BN + act, then 1x1 conv + BN (fused) ---
    out2d = pl.pallas_call(
        functools.partial(_dw_pw_kernel, k=k, Ho=Ho, Wo=Wo, non_linear=non_linear),
        out_shape=jax.ShapeDtypeStruct((N, HoWo, Op), jnp.float32),
        grid=(N,),
        in_specs=[
            pl.BlockSpec((1, 4, Hp2, Wp2, Ep), lambda n: (n, 0, 0, 0, 0)),
            pl.BlockSpec((K2, Ep), lambda n: (0, 0)),
            pl.BlockSpec((1, Ep), lambda n: (0, 0)),
            pl.BlockSpec((Ep, Op), lambda n: (0, 0)),
            pl.BlockSpec((1, Op), lambda n: (0, 0)),
        ],
        out_specs=pl.BlockSpec((1, HoWo, Op), lambda n: (n, 0, 0)),
        compiler_params=pltpu.CompilerParams(
            dimension_semantics=("parallel",),
            vmem_limit_bytes=VMEM_LIMIT),
    )(planes, wdw_eff, b2_eff, w3_bf, b3_eff)

    # ---- strip channel padding; NCHW only at the model boundary -------------
    out = out2d.reshape(N, Ho, Wo, Op)[..., :Cout]
    return jnp.transpose(out, (0, 3, 1, 2))


# ---------------------------------------------------------------------------
# independent pure-JAX reference (f32) for correctness check
# ---------------------------------------------------------------------------
def reference_forward(x, params, kernel_size, non_linear):
    k = kernel_size
    pad = 1 if k == 3 else 2
    E = params["w1"].shape[0]

    def bn(y, g, b, m, v):
        c = lambda t: t[None, :, None, None]
        return (y - c(m)) / jnp.sqrt(c(v) + EPS) * c(g) + c(b)

    dn = ("NCHW", "OIHW", "NCHW")
    y = lax.conv_general_dilated(x, params["w1"], (1, 1), "VALID",
                                 dimension_numbers=dn)
    y = y + params["b1"][None, :, None, None]
    y = _act(bn(y, params["g1"], params["be1"], params["m1"], params["v1"]),
             non_linear)

    y = lax.conv_general_dilated(y, params["w2"], (2, 2),
                                 [(pad, pad), (pad, pad)],
                                 dimension_numbers=dn, feature_group_count=E)
    y = y + params["b2"][None, :, None, None]
    y = _act(bn(y, params["g2"], params["be2"], params["m2"], params["v2"]),
             non_linear)

    y = lax.conv_general_dilated(y, params["w3"], (1, 1), "VALID",
                                 dimension_numbers=dn)
    y = y + params["b3"][None, :, None, None]
    y = bn(y, params["g3"], params["be3"], params["m3"], params["v3"])
    return y


# ---------------------------------------------------------------------------
if __name__ == "__main__":
    key = jax.random.PRNGKey(0)
    k_in, k_par = jax.random.split(key)

    # small shapes consistent with the module
    N, Cin, H, W = 2, 4, 16, 16
    exp_size, Cout = 8, 8
    kernel_size = 3
    non_linear = "HS"      # HardSwish path; "RE" -> ReLU path

    x = jax.random.normal(k_in, (N, Cin, H, W), jnp.float32)
    params = init_params(k_par, Cin, Cout, exp_size, kernel_size)

    out = downsample_unit(x, params, kernel_size, non_linear)
    out = jax.block_until_ready(out)

    ref = jax.block_until_ready(reference_forward(x, params, kernel_size, non_linear))
    assert out.shape == ref.shape, (out.shape, ref.shape)
    # bf16 matmul operands + bf16 intermediates -> loosened tolerance.
    np.testing.assert_allclose(np.asarray(out), np.asarray(ref), atol=5e-2, rtol=5e-2)

    print("KERNEL_OK")
</pallas_src>

<mosaic_0001>
module attributes {stable_mosaic.version = 11 : i64} {
  func.func @_conv1_kernel(%arg0: i32, %arg1: i32, %arg2: memref<1x128x4xbf16, #tpu.memory_space<vmem>>, %arg3: memref<4x128xbf16, #tpu.memory_space<vmem>>, %arg4: memref<1x128xf32, #tpu.memory_space<vmem>>, %arg5: memref<1x128x128xbf16, #tpu.memory_space<vmem>>) attributes {dimension_semantics = [#tpu.dimension_semantics<parallel>, #tpu.dimension_semantics<parallel>], iteration_bounds = array<i64: 2, 2>, scalar_prefetch = 0 : i64, scratch_operands = 0 : i64, tpu.core_type = #tpu.core_type<tc>, window_params = [{transform_indices = @transform_0, window_bounds = array<i64: 1, 128, 4>}, {pipeline_mode = #tpu.pipeline_mode<synchronous>, transform_indices = @transform_1, window_bounds = array<i64: 4, 128>}, {pipeline_mode = #tpu.pipeline_mode<synchronous>, transform_indices = @transform_2, window_bounds = array<i64: 1, 128>}, {transform_indices = @transform_3, window_bounds = array<i64: 1, 128, 128>}]} {
    %c0 = arith.constant 0 : index
    %c0_0 = arith.constant 0 : index
    %c0_1 = arith.constant 0 : index
    %0 = vector.load %arg2[%c0, %c0_0, %c0_1] : memref<1x128x4xbf16, #tpu.memory_space<vmem>>, vector<1x128x4xbf16>
    %1 = vector.shape_cast %0 : vector<1x128x4xbf16> to vector<128x4xbf16>
    %c0_2 = arith.constant 0 : index
    %c0_3 = arith.constant 0 : index
    %2 = vector.load %arg3[%c0_2, %c0_3] : memref<4x128xbf16, #tpu.memory_space<vmem>>, vector<4x128xbf16>
    %cst = arith.constant dense<0.000000e+00> : vector<128x128xf32>
    %3 = tpu.matmul %1, %2, %cst {dimension_numbers = #tpu.dot_dimension_numbers<[1], [0], [0], [1], [0, 0, 1, 1], [], []>} : vector<128x4xbf16>, vector<4x128xbf16>, vector<128x128xf32> -> vector<128x128xf32>
    %c0_4 = arith.constant 0 : index
    %c0_5 = arith.constant 0 : index
    %4 = vector.load %arg4[%c0_4, %c0_5] : memref<1x128xf32, #tpu.memory_space<vmem>>, vector<1x128xf32>
    %5 = vector.broadcast %4 : vector<1x128xf32> to vector<128x128xf32>
    %6 = arith.addf %3, %5 : vector<128x128xf32>
    %cst_6 = arith.constant 3.000000e+00 : f32
    %7 = vector.broadcast %cst_6 : f32 to vector<128x128xf32>
    %8 = arith.addf %6, %7 : vector<128x128xf32>
    %cst_7 = arith.constant 0.000000e+00 : f32
    %cst_8 = arith.constant 6.000000e+00 : f32
    %9 = vector.broadcast %cst_7 : f32 to vector<128x128xf32>
    %10 = arith.maximumf %9, %8 : vector<128x128xf32>
    %11 = vector.broadcast %cst_8 : f32 to vector<128x128xf32>
    %12 = arith.minimumf %11, %10 : vector<128x128xf32>
    %13 = arith.mulf %6, %12 : vector<128x128xf32>
    %cst_9 = arith.constant 0.166666672 : f32
    %14 = vector.broadcast %cst_9 : f32 to vector<128x128xf32>
    %15 = arith.mulf %13, %14 : vector<128x128xf32>
    %16 = arith.truncf %15 : vector<128x128xf32> to vector<128x128xbf16>
    %c0_10 = arith.constant 0 : index
    %c0_11 = arith.constant 0 : index
    %c0_12 = arith.constant 0 : index
    %17 = vector.load %arg5[%c0_10, %c0_11, %c0_12] : memref<1x128x128xbf16, #tpu.memory_space<vmem>>, vector<1x128x128xbf16>
    %18 = vector.shape_cast %17 : vector<1x128x128xbf16> to vector<128x128xbf16>
    %19 = vector.shape_cast %16 : vector<128x128xbf16> to vector<1x128x128xbf16>
    tpu.vector_store %arg5[%c0_10, %c0_11, %c0_12], %19 {strides = array<i32>} : memref<1x128x128xbf16, #tpu.memory_space<vmem>>, vector<1x128x128xbf16>,
    return
  }
  func.func @transform_0(%arg0: i32, %arg1: i32) -> (i32, i32, i32) {
    %c0_i32 = arith.constant 0 : i32
    %c0_i32_0 = arith.constant 0 : i32
    return %arg0, %arg1, %c0_i32 : i32, i32, i32
  }
  func.func @transform_1(%arg0: i32, %arg1: i32) -> (i32, i32) {
    %c0_i32 = arith.constant 0 : i32
    %c0_i32_0 = arith.constant 0 : i32
    %c0_i32_1 = arith.constant 0 : i32
    return %c0_i32, %c0_i32_0 : i32, i32
  }
  func.func @transform_2(%arg0: i32, %arg1: i32) -> (i32, i32) {
    %c0_i32 = arith.constant 0 : i32
    %c0_i32_0 = arith.constant 0 : i32
    %c0_i32_1 = arith.constant 0 : i32
    return %c0_i32, %c0_i32_0 : i32, i32
  }
  func.func @transform_3(%arg0: i32, %arg1: i32) -> (i32, i32, i32) {
    %c0_i32 = arith.constant 0 : i32
    %c0_i32_0 = arith.constant 0 : i32
    return %arg0, %arg1, %c0_i32 : i32, i32, i32
  }
}

</mosaic_0001>

<llo_original>
// kernel: tpu_custom_call.1
$region0: #{tpu_custom_call.1}
  #allocation0 [shape = 'u32[]', space=smem, size = 0x4, offset = 0x4, fixed_abs, tag = 'smem constant byte address 0x4 - core index']
  #allocation1 [shape = 'u32[144,128]{1,0:T(1,128)}', space=vmem, size = 0x12000, scoped, tag = 'internal scratch']
  %s0 = inlined_call_operand.vmem [shape: bf16[2,256,4], index: 0, kind: input, shape index: {}]
  %s1 = inlined_call_operand.vmem [shape: bf16[4,128], index: 1, kind: input, shape index: {}]
  %s2 = inlined_call_operand.vmem [shape: f32[1,128], index: 2, kind: input, shape index: {}]
  %s3 = inlined_call_operand.hbm [shape: bf16[2,256,128], index: 3, kind: output, shape index: {}]
  %s4 = sld [smem:[#allocation0]]
  $region45: #{tpu_custom_call.1} parent=0
    _
  %s6 = ssub.s32 1, %s4
  %s7 = scalar_select 0, %s6, %s4
  $region1: #{tpu_custom_call.1} parent=0
    #allocation2 [shape = 'u8[65536]{0}', space=vmem, size = 0x10000, scoped, tag = 'output window, operand 0']
    #allocation3 [shape = 's32[2]{0}', space=sflag, size = 0x8, scoped, tag = 'scoped memory for tpu_custom_call.1']
    %8 = vsyncpa [#allocation3], 0
    %s9 = scalar_lea.sflag [#allocation3], 1
    %10 = vsyncpa %s9, 0
    loop: start=0, step=1, limit=6
    $region2: #{tpu_custom_call.1} parent=1 // loop_pre_header
      _
    $region3: #{tpu_custom_call.1} parent=1 // loop_header
      %s12 = sphi 0, %s16
      %p13 = scmp.ge.s32.totalorder %s12, 6
      %s19 = sphi 0, %s31
      %s20 = sphi 0, %s27
      %s21 = sphi 0, %s19
      %s22 = sphi 0, %s20
      %s23 = sphi 0, %s21
      %s24 = sphi 0, %s22
      %s36 = sphi 0, %s38
      %s39 = sphi 0, %s36
      %s40 = sphi 0, %s39
      %s56 = sphi 0, %s40
      %s60 = sphi 0, %s60
      %s62 = sphi 0, %s60
      %s63 = sphi 0, %s62
      %s77 = sphi 0, %s63
      %s81 = sphi 0, %s81
      %s83 = sphi 0, %s81
      %s84 = sphi 0, %s83
      %s98 = sphi 0, %s84
      %s106 = sphi 0, %s108
      %s109 = sphi 0, %s106
      %s110 = sphi 0, %s109
      %s126 = sphi 0, %s110
    $region4: #{tpu_custom_call.1} parent=1 // loop_header_branch
      %15 = sbr.rel (%p13) target = $region8
    $region5: #{tpu_custom_call.1} parent=1 // loop_body
      %s17 = ssub.s32 %s12, 1
      %s18 = ssub.s32 %s12, 2
      %s25 = sadd.s32 1, %s20
      %p26 = scmp.ge.s32.totalorder %s25, 2
      %s27 = scalar_select %p26, 0, %s25
      %s28 = sadd.s32 1, %s19
      %s29 = scalar_select %p26, %s28, %s19
      %p30 = scmp.ge.s32.totalorder %s29, 2
      %s31 = scalar_select %p30, 0, %s29
      %s32 = ssub.s32 %s19, %s31
      %s33 = ssub.s32 %s20, %s27
      %s34 = sor.u32 %s32, %s33
      %p35 = scmp.eq.s32.totalorder %s34, 0
      %s37 = sadd.s32 %s36, 1
      %s38 = scalar_select %p35, %s36, %s37
      %p41 = pneg %p35
      %p42 = scmp.eq.s32.totalorder %s12, 3
      %p43 = por %p41, %p42
      %p44 = scmp.ne.s32.totalorder %s36, %s39
      %p45 = scmp.eq.s32.totalorder %s12, 0
      %p46 = por %p44, %p45
      %p47 = scmp.ne.s32.totalorder %s36, %s39
      %p48 = scmp.eq.s32.totalorder %s17, 3
      %p49 = por %p47, %p48
      %p50 = scmp.ne.s32.totalorder %s39, %s40
      %p51 = scmp.eq.s32.totalorder %s17, 0
      %p52 = por %p50, %p51
      %p53 = scmp.ne.s32.totalorder %s39, %s40
      %p54 = scmp.eq.s32.totalorder %s18, 3
      %p55 = por %p53, %p54
      %p57 = scmp.ne.s32.totalorder %s40, %s56
      %p58 = scmp.eq.s32.totalorder %s18, 0
      %p59 = por %p57, %p58
      %s61 = sadd.s32 %s60, 1
      %p64 = scmp.eq.s32.totalorder %s12, 3
      %p65 = scmp.ne.s32.totalorder %s60, %s62
      %p66 = scmp.eq.s32.totalorder %s12, 0
      %p67 = por %p65, %p66
      %p68 = scmp.ne.s32.totalorder %s60, %s62
      %p69 = scmp.eq.s32.totalorder %s17, 3
      %p70 = por %p68, %p69
      %p71 = scmp.ne.s32.totalorder %s62, %s63
      %p72 = scmp.eq.s32.totalorder %s17, 0
      %p73 = por %p71, %p72
      %p74 = scmp.ne.s32.totalorder %s62, %s63
      %p75 = scmp.eq.s32.totalorder %s18, 3
      %p76 = por %p74, %p75
      %p78 = scmp.ne.s32.totalorder %s63, %s77
      %p79 = scmp.eq.s32.totalorder %s18, 0
      %p80 = por %p78, %p79
      %s82 = sadd.s32 %s81, 1
      %p85 = scmp.eq.s32.totalorder %s12, 3
      %p86 = scmp.ne.s32.totalorder %s81, %s83
      %p87 = scmp.eq.s32.totalorder %s12, 0
      %p88 = por %p86, %p87
      %p89 = scmp.ne.s32.totalorder %s81, %s83
      %p90 = scmp.eq.s32.totalorder %s17, 3
      %p91 = por %p89, %p90
      %p92 = scmp.ne.s32.totalorder %s83, %s84
      %p93 = scmp.eq.s32.totalorder %s17, 0
      %p94 = por %p92, %p93
      %p95 = scmp.ne.s32.totalorder %s83, %s84
      %p96 = scmp.eq.s32.totalorder %s18, 3
      %p97 = por %p95, %p96
      %p99 = scmp.ne.s32.totalorder %s84, %s98
      %p100 = scmp.eq.s32.totalorder %s18, 0
      %p101 = por %p99, %p100
      %s102 = ssub.s32 %s19, %s31
      %s103 = ssub.s32 %s20, %s27
      %s104 = sor.u32 %s102, %s103
      %p105 = scmp.eq.s32.totalorder %s104, 0
      %s107 = sadd.s32 %s106, 1
      %s108 = scalar_select %p105, %s106, %s107
      %p111 = pneg %p105
      %p112 = scmp.eq.s32.totalorder %s12, 3
      %p113 = por %p111, %p112
      %p114 = scmp.ne.s32.totalorder %s106, %s109
      %p115 = scmp.eq.s32.totalorder %s12, 0
      %p116 = por %p114, %p115
      %p117 = scmp.ne.s32.totalorder %s106, %s109
      %p118 = scmp.eq.s32.totalorder %s17, 3
      %p119 = por %p117, %p118
      %p120 = scmp.ne.s32.totalorder %s109, %s110
      %p121 = scmp.eq.s32.totalorder %s17, 0
      %p122 = por %p120, %p121
      %p123 = scmp.ne.s32.totalorder %s109, %s110
      %p124 = scmp.eq.s32.totalorder %s18, 3
      %p125 = por %p123, %p124
      %p127 = scmp.ne.s32.totalorder %s110, %s126
      %p128 = scmp.eq.s32.totalorder %s18, 0
      %p129 = por %p127, %p128
      %p130 = scmp.le.s32.totalorder 1, %s12
      %p131 = scmp.lt.s32.totalorder %s12, 5
      %p132 = pnand %p130, %p131
      %p133 = pneg %p132
      // Predicated region
      $region9: #{tpu_custom_call.1} parent=5 // pred_check
        _
      $region10: #{tpu_custom_call.1} parent=5 // pred_check_branch
        %135 = sbr.rel (%p132) target = $region12
      $region11: #{tpu_custom_call.1} parent=5 // pred_region
        %s136 = ssub.s32 %s12, 1
        // Predicated region
        $region13: #{tpu_custom_call.1} parent=11 // pred_check
          %p137 = pneg %p73
        $region14: #{tpu_custom_call.1} parent=11 // pred_check_branch
          %139 = sbr.rel (%p137) target = $region16
        $region15: #{tpu_custom_call.1} parent=11 // pred_region
          _
        $region16: #{tpu_custom_call.1} parent=11 // pred_fallthru
          _
        // Predicated region
        $region17: #{tpu_custom_call.1} parent=11 // pred_check
          %p140 = pneg %p94
        $region18: #{tpu_custom_call.1} parent=11 // pred_check_branch
          %142 = sbr.rel (%p140) target = $region20
        $region19: #{tpu_custom_call.1} parent=11 // pred_region
          _
        $region20: #{tpu_custom_call.1} parent=11 // pred_fallthru
          _
      $region12: #{tpu_custom_call.1} parent=5 // pred_fallthru
        _
      %p143 = scmp.lt.s32.totalorder %s12, 4
      // Predicated region
      $region21: #{tpu_custom_call.1} parent=5 // pred_check
        %p144 = pneg %p143
      $region22: #{tpu_custom_call.1} parent=5 // pred_check_branch
        %146 = sbr.rel (%p144) target = $region24
      $region23: #{tpu_custom_call.1} parent=5 // pred_region
        // Predicated region
        $region25: #{tpu_custom_call.1} parent=23 // pred_check
          %p147 = pneg %p46
        $region26: #{tpu_custom_call.1} parent=23 // pred_check_branch
          %149 = sbr.rel (%p147) target = $region28
        $region27: #{tpu_custom_call.1} parent=23 // pred_region
          %s150 = smul.u32 16, %s20
          %p151 = scmp.lt.s32.totalorder %s19, 1
          %s152 = scalar_select %p151, %s19, 1
          %p153 = scmp.lt.s32.totalorder %s150, 31
          %s154 = scalar_select %p153, %s150, 31
          %s155 = smul.addr %s152, 32
          %s156 = sadd.s32 %s154, %s155
          %s157 = smul.addr %s156, 4
          %s158 = scalar_lea.vmem %s0, %s157
          %s159 = smul.u32 16, %s20
        $region28: #{tpu_custom_call.1} parent=23 // pred_fallthru
          _
      $region24: #{tpu_custom_call.1} parent=5 // pred_fallthru
        _
      %p160 = scmp.le.s32.totalorder 1, %s12
      %p161 = scmp.lt.s32.totalorder %s12, 5
      %p162 = pnand %p160, %p161
      %p163 = pneg %p162
      // Predicated region
      $region29: #{tpu_custom_call.1} parent=5 // pred_check
        _
      $region30: #{tpu_custom_call.1} parent=5 // pred_check_branch
        %165 = sbr.rel (%p162) target = $region32
      $region31: #{tpu_custom_call.1} parent=5 // pred_region
        %s166 = ssub.s32 %s12, 1
        %s167 = smul.u32 16, %s22
        %p168 = scmp.lt.s32.totalorder %s21, 1
        %s169 = scalar_select %p168, %s21, 1
        %p170 = scmp.lt.s32.totalorder %s167, 31
        %s171 = scalar_select %p170, %s167, 31
        %s172 = smul.addr %s169, 32
        %s173 = sadd.s32 %s171, %s172
        %s174 = smul.addr %s173, 4
        %s175 = scalar_lea.vmem %s0, %s174
        %p176 = pneg %p52
        %p177 = pneg %p49
        %p178 = pneg %p73
        %p179 = pneg %p70
        %p180 = pneg %p94
        %p181 = pneg %p91
        %p182 = pneg %p122
        %p183 = pneg %p119
        %s184 = sand.u32 %s109, 1
        %s185 = scalar_lea.sflag [#allocation3], %s184
        %s186 = sand.u32 %s109, 1
        %s187 = smul.addr %s186, 64
        %s188 = scalar_lea.vmem [#allocation2], %s187
        %s189 = smul.u32 16, %s22
        %p190 = scmp.lt.s32.totalorder %s21, 1
        %s191 = scalar_select %p190, %s21, 1
        %p192 = scmp.lt.s32.totalorder %s189, 31
        %s193 = scalar_select %p192, %s189, 31
        %s194 = smul.addr %s191, 32
        %s195 = sadd.s32 %s193, %s194
        %s196 = smul.addr %s195, 4
        %s197 = scalar_lea.vmem %s0, %s196
        %s198 = smul.u32 16, %s22
        %s199 = smul.u32 16, %s22
        %v201 = vld [vmem:[%s197] sm:$0xf]
        %v202 = vld [vmem:[%s197 + $0x4] sm:$0xf]
        %v203 = vld [vmem:[%s197 + $0x8] sm:$0xf]
        %v204 = vld [vmem:[%s197 + $0xc] sm:$0xf]
        %v205 = vld [vmem:[%s197 + $0x10] sm:$0xf]
        %v206 = vld [vmem:[%s197 + $0x14] sm:$0xf]
        %v207 = vld [vmem:[%s197 + $0x18] sm:$0xf]
        %v208 = vld [vmem:[%s197 + $0x1c] sm:$0xf]
        %v209 = vld [vmem:[%s197 + $0x20] sm:$0xf]
        %v210 = vld [vmem:[%s197 + $0x24] sm:$0xf]
        %v211 = vld [vmem:[%s197 + $0x28] sm:$0xf]
        %v212 = vld [vmem:[%s197 + $0x2c] sm:$0xf]
        %v213 = vld [vmem:[%s197 + $0x30] sm:$0xf]
        %v214 = vld [vmem:[%s197 + $0x34] sm:$0xf]
        %v215 = vld [vmem:[%s197 + $0x38] sm:$0xf]
        %v216 = vld [vmem:[%s197 + $0x3c] sm:$0xf]
        %v217 = vld [vmem:[%s1] sm:$0x3]
        %v218 = vld [vmem:[%s2] sm:$0x1]
        %v220 = vlaneseq
        %v221 = vshrl.u32 %v220, 7
        %v222 = vsub.s32 0, %v221
        %v223 = vrot.slane %v218, %v222
        %v241 = vunpack.c.l.b16 %v201
        %v242 = vunpack.c.l.b16 %v202
        %v243 = vunpack.c.l.b16 %v203
        %v244 = vunpack.c.l.b16 %v204
        %v245 = vunpack.c.l.b16 %v205
        %v246 = vunpack.c.l.b16 %v206
        %v247 = vunpack.c.l.b16 %v207
        %v248 = vunpack.c.l.b16 %v208
        %v249 = vunpack.c.l.b16 %v209
        %v250 = vunpack.c.l.b16 %v210
        %v251 = vunpack.c.l.b16 %v211
        %v252 = vunpack.c.l.b16 %v212
        %v253 = vunpack.c.l.b16 %v213
        %v254 = vunpack.c.l.b16 %v214
        %v255 = vunpack.c.l.b16 %v215
        %v256 = vunpack.c.l.b16 %v216
        %v257 = vpack.c.b16 %v242, %v241
        %v258 = vpack.c.b16 %v244, %v243
        %v259 = vpack.c.b16 %v246, %v245
        %v260 = vpack.c.b16 %v248, %v247
        %v261 = vpack.c.b16 %v250, %v249
        %v262 = vpack.c.b16 %v252, %v251
        %v263 = vpack.c.b16 %v254, %v253
        %v264 = vpack.c.b16 %v256, %v255
        %vm265 = vcmask 31744
        %v267 = vsel %vm265, %v257, 0
        %v270 = vsel %vm265, %v258, 0
        %v273 = vsel %vm265, %v259, 0
        %v276 = vsel %vm265, %v260, 0
        %v279 = vsel %vm265, %v261, 0
        %v282 = vsel %vm265, %v262, 0
        %v285 = vsel %vm265, %v263, 0
        %v288 = vsel %vm265, %v264, 0
        %vm290 = vcmask 1041408
        %v292 = vsel %vm290, %v217, 0
        %294 = vmatprep.subr.bf16.mxu0 0
        %295 = vmatpush1.bf16.msra.mxu0 %v292
        %296 = vmatprep.subr.bf16.mxu0 0
        %297 = vmatpush1.bf16.msra.mxu0 0
        %298 = vmatprep.subr.bf16.mxu0 0
        %299 = vmatpush1.bf16.msra.mxu0 0
        %300 = vmatprep.subr.bf16.mxu0 0
        %301 = vmatpush1.bf16.msra.mxu0 0
        %302 = vmatprep.subr.bf16.mxu0 0
        %303 = vmatpush1.bf16.msra.mxu0 0
        %304 = vmatprep.subr.bf16.mxu0 0
        %305 = vmatpush1.bf16.msra.mxu0 0
        %306 = vmatprep.subr.bf16.mxu0 0
        %307 = vmatpush1.bf16.msra.mxu0 0
        %308 = vmatprep.subr.bf16.mxu0 0
        %309 = vmatpush1.bf16.msra.mxu0 0
        %310 = vmatprep.subr.bf16.mxu0 0
        %311 = vmatpush1.bf16.msra.mxu0 0
        %312 = vmatprep.subr.bf16.mxu0 0
        %313 = vmatpush1.bf16.msra.mxu0 0
        %314 = vmatprep.subr.bf16.mxu0 0
        %315 = vmatpush1.bf16.msra.mxu0 0
        %316 = vmatprep.subr.bf16.mxu0 0
        %317 = vmatpush1.bf16.msra.mxu0 0
        %318 = vmatprep.subr.bf16.mxu0 0
        %319 = vmatpush1.bf16.msra.mxu0 0
        %320 = vmatprep.subr.bf16.mxu0 0
        %321 = vmatpush1.bf16.msra.mxu0 0
        %322 = vmatprep.subr.bf16.mxu0 0
        %323 = vmatpush1.bf16.msra.mxu0 0
        %324 = vmatprep.subr.bf16.mxu0 0
        %325 = vmatpush1.bf16.msra.mxu0 0
        %326 = vmatprep.mubr.bf16.mxu0 0
        %327 = vmatmul.mubr.bf16.gmra.mrb[0].mxu0 %v267
        %v328 = vpop.f32.mrb[0].mxu0
        %v329 = vadd.f32 %v223, %v328
        %v330 = vpop.f32.mrb[0].mxu0
        %v331 = vpop.f32.mrb[0].mxu0
        %v332 = vadd.f32 %v223, %v331
        %v333 = vpop.f32.mrb[0].mxu0
        %334 = vmatprep.mubr.bf16.mxu0 0
        %335 = vmatmul.mubr.bf16.gmra.mrb[0].mxu0 %v270
        %v336 = vpop.f32.mrb[0].mxu0
        %v337 = vadd.f32 %v223, %v336
        %v338 = vpop.f32.mrb[0].mxu0
        %v339 = vpop.f32.mrb[0].mxu0
        %v340 = vadd.f32 %v223, %v339
        %v341 = vpop.f32.mrb[0].mxu0
        %342 = vmatprep.mubr.bf16.mxu0 0
        %343 = vmatmul.mubr.bf16.gmra.mrb[0].mxu0 %v273
        %v344 = vpop.f32.mrb[0].mxu0
        %v345 = vadd.f32 %v223, %v344
        %v346 = vpop.f32.mrb[0].mxu0
        %v347 = vpop.f32.mrb[0].mxu0
        %v348 = vadd.f32 %v223, %v347
        %v349 = vpop.f32.mrb[0].mxu0
        %350 = vmatprep.mubr.bf16.mxu0 0
        %351 = vmatmul.mubr.bf16.gmra.mrb[0].mxu0 %v276
        %v352 = vpop.f32.mrb[0].mxu0
        %v353 = vadd.f32 %v223, %v352
        %v354 = vpop.f32.mrb[0].mxu0
        %v355 = vpop.f32.mrb[0].mxu0
        %v356 = vadd.f32 %v223, %v355
        %v357 = vpop.f32.mrb[0].mxu0
        %358 = vmatprep.mubr.bf16.mxu0 0
        %359 = vmatmul.mubr.bf16.gmra.mrb[0].mxu0 %v279
        %v360 = vpop.f32.mrb[0].mxu0
        %v361 = vadd.f32 %v223, %v360
        %v362 = vpop.f32.mrb[0].mxu0
        %v363 = vpop.f32.mrb[0].mxu0
        %v364 = vadd.f32 %v223, %v363
        %v365 = vpop.f32.mrb[0].mxu0
        %366 = vmatprep.mubr.bf16.mxu0 0
        %367 = vmatmul.mubr.bf16.gmra.mrb[0].mxu0 %v282
        %v368 = vpop.f32.mrb[0].mxu0
        %v369 = vadd.f32 %v223, %v368
        %v370 = vpop.f32.mrb[0].mxu0
        %v371 = vpop.f32.mrb[0].mxu0
        %v372 = vadd.f32 %v223, %v371
        %v373 = vpop.f32.mrb[0].mxu0
        %374 = vmatprep.mubr.bf16.mxu0 0
        %375 = vmatmul.mubr.bf16.gmra.mrb[0].mxu0 %v285
        %v376 = vpop.f32.mrb[0].mxu0
        %v377 = vadd.f32 %v223, %v376
        %v378 = vpop.f32.mrb[0].mxu0
        %v379 = vpop.f32.mrb[0].mxu0
        %v380 = vadd.f32 %v223, %v379
        %v381 = vpop.f32.mrb[0].mxu0
        %382 = vmatprep.mubr.bf16.mxu0 0
        %383 = vmatmul.mubr.bf16.gmra.mrb[0].mxu0 %v288
        %v384 = vpop.f32.mrb[0].mxu0
        %v385 = vadd.f32 %v223, %v384
        %v386 = vpop.f32.mrb[0].mxu0
        %v387 = vpop.f32.mrb[0].mxu0
        %v388 = vadd.f32 %v223, %v387
        %v389 = vpop.f32.mrb[0].mxu0
        %390 = vdwg.mxu0
        %v391 = vadd.f32 %v329, 3.0
        %v392 = vadd.f32 %v332, 3.0
        %v393 = vadd.f32 %v337, 3.0
        %v394 = vadd.f32 %v340, 3.0
        %v395 = vadd.f32 %v345, 3.0
        %v396 = vadd.f32 %v348, 3.0
        %v397 = vadd.f32 %v353, 3.0
        %v398 = vadd.f32 %v356, 3.0
        %v399 = vadd.f32 %v361, 3.0
        %v400 = vadd.f32 %v364, 3.0
        %v401 = vadd.f32 %v369, 3.0
        %v402 = vadd.f32 %v372, 3.0
        %v403 = vadd.f32 %v377, 3.0
        %v404 = vadd.f32 %v380, 3.0
        %v405 = vadd.f32 %v385, 3.0
        %v406 = vadd.f32 %v388, 3.0
        %v407 = vmax.f32 %v391, 0.0
        %v408 = vmax.f32 %v392, 0.0
        %v409 = vmax.f32 %v393, 0.0
        %v410 = vmax.f32 %v394, 0.0
        %v411 = vmax.f32 %v395, 0.0
        %v412 = vmax.f32 %v396, 0.0
        %v413 = vmax.f32 %v397, 0.0
        %v414 = vmax.f32 %v398, 0.0
        %v415 = vmax.f32 %v399, 0.0
        %v416 = vmax.f32 %v400, 0.0
        %v417 = vmax.f32 %v401, 0.0
        %v418 = vmax.f32 %v402, 0.0
        %v419 = vmax.f32 %v403, 0.0
        %v420 = vmax.f32 %v404, 0.0
        %v421 = vmax.f32 %v405, 0.0
        %v422 = vmax.f32 %v406, 0.0
        %v423 = vmin.f32 %v407, 6.0
        %v424 = vmin.f32 %v408, 6.0
        %v425 = vmin.f32 %v409, 6.0
        %v426 = vmin.f32 %v410, 6.0
        %v427 = vmin.f32 %v411, 6.0
        %v428 = vmin.f32 %v412, 6.0
        %v429 = vmin.f32 %v413, 6.0
        %v430 = vmin.f32 %v414, 6.0
        %v431 = vmin.f32 %v415, 6.0
        %v432 = vmin.f32 %v416, 6.0
        %v433 = vmin.f32 %v417, 6.0
        %v434 = vmin.f32 %v418, 6.0
        %v435 = vmin.f32 %v419, 6.0
        %v436 = vmin.f32 %v420, 6.0
        %v437 = vmin.f32 %v421, 6.0
        %v438 = vmin.f32 %v422, 6.0
        %v439 = vmul.f32 %v329, %v423
        %v440 = vmul.f32 %v332, %v424
        %v441 = vmul.f32 %v337, %v425
        %v442 = vmul.f32 %v340, %v426
        %v443 = vmul.f32 %v345, %v427
        %v444 = vmul.f32 %v348, %v428
        %v445 = vmul.f32 %v353, %v429
        %v446 = vmul.f32 %v356, %v430
        %v447 = vmul.f32 %v361, %v431
        %v448 = vmul.f32 %v364, %v432
        %v449 = vmul.f32 %v369, %v433
        %v450 = vmul.f32 %v372, %v434
        %v451 = vmul.f32 %v377, %v435
        %v452 = vmul.f32 %v380, %v436
        %v453 = vmul.f32 %v385, %v437
        %v454 = vmul.f32 %v388, %v438
        %v455 = vmul.f32 %v439, 0.16666667
        %v456 = vmul.f32 %v440, 0.16666667
        %v457 = vmul.f32 %v441, 0.16666667
        %v458 = vmul.f32 %v442, 0.16666667
        %v459 = vmul.f32 %v443, 0.16666667
        %v460 = vmul.f32 %v444, 0.16666667
        %v461 = vmul.f32 %v445, 0.16666667
        %v462 = vmul.f32 %v446, 0.16666667
        %v463 = vmul.f32 %v447, 0.16666667
        %v464 = vmul.f32 %v448, 0.16666667
        %v465 = vmul.f32 %v449, 0.16666667
        %v466 = vmul.f32 %v450, 0.16666667
        %v467 = vmul.f32 %v451, 0.16666667
        %v468 = vmul.f32 %v452, 0.16666667
        %v469 = vmul.f32 %v453, 0.16666667
        %v470 = vmul.f32 %v454, 0.16666667
        %v471 = vpack.c.bf16 %v456, %v455
        %v472 = vpack.c.bf16 %v458, %v457
        %v473 = vpack.c.bf16 %v460, %v459
        %v474 = vpack.c.bf16 %v462, %v461
        %v475 = vpack.c.bf16 %v464, %v463
        %v476 = vpack.c.bf16 %v466, %v465
        %v477 = vpack.c.bf16 %v468, %v467
        %v478 = vpack.c.bf16 %v470, %v469
        %v487 = vunpack.c.l.b16 %v471
        %v488 = vunpack.c.h.b16 %v471
        %v489 = vunpack.c.l.b16 %v472
        %v490 = vunpack.c.h.b16 %v472
        %v491 = vunpack.c.l.b16 %v473
        %v492 = vunpack.c.h.b16 %v473
        %v493 = vunpack.c.l.b16 %v474
        %v494 = vunpack.c.h.b16 %v474
        %v495 = vunpack.c.l.b16 %v475
        %v496 = vunpack.c.h.b16 %v475
        %v497 = vunpack.c.l.b16 %v476
        %v498 = vunpack.c.h.b16 %v476
        %v499 = vunpack.c.l.b16 %v477
        %v500 = vunpack.c.h.b16 %v477
        %v501 = vunpack.c.l.b16 %v478
        %v502 = vunpack.c.h.b16 %v478
        %v503 = vpack.c.b16 %v487, %v487
        %v504 = vpack.c.b16 %v488, %v488
        %v505 = vpack.c.b16 %v489, %v489
        %v506 = vpack.c.b16 %v490, %v490
        %v507 = vpack.c.b16 %v491, %v491
        %v508 = vpack.c.b16 %v492, %v492
        %v509 = vpack.c.b16 %v493, %v493
        %v510 = vpack.c.b16 %v494, %v494
        %v511 = vpack.c.b16 %v495, %v495
        %v512 = vpack.c.b16 %v496, %v496
        %v513 = vpack.c.b16 %v497, %v497
        %v514 = vpack.c.b16 %v498, %v498
        %v515 = vpack.c.b16 %v499, %v499
        %v516 = vpack.c.b16 %v500, %v500
        %v517 = vpack.c.b16 %v501, %v501
        %v518 = vpack.c.b16 %v502, %v502
        %535 = vst [vmem:[%s188] sm:$0xf] %v503
        %536 = vst [vmem:[%s188 + $0x4] sm:$0xf] %v504
        %537 = vst [vmem:[%s188 + $0x8] sm:$0xf] %v505
        %538 = vst [vmem:[%s188 + $0xc] sm:$0xf] %v506
        %539 = vst [vmem:[%s188 + $0x10] sm:$0xf] %v507
        %540 = vst [vmem:[%s188 + $0x14] sm:$0xf] %v508
        %541 = vst [vmem:[%s188 + $0x18] sm:$0xf] %v509
        %542 = vst [vmem:[%s188 + $0x1c] sm:$0xf] %v510
        %543 = vst [vmem:[%s188 + $0x20] sm:$0xf] %v511
        %544 = vst [vmem:[%s188 + $0x24] sm:$0xf] %v512
        %545 = vst [vmem:[%s188 + $0x28] sm:$0xf] %v513
        %546 = vst [vmem:[%s188 + $0x2c] sm:$0xf] %v514
        %547 = vst [vmem:[%s188 + $0x30] sm:$0xf] %v515
        %548 = vst [vmem:[%s188 + $0x34] sm:$0xf] %v516
        %549 = vst [vmem:[%s188 + $0x38] sm:$0xf] %v517
        %550 = vst [vmem:[%s188 + $0x3c] sm:$0xf] %v518
        %s551 = sand.u32 %s109, 1
        %s552 = scalar_lea.sflag [#allocation3], %s551
        %s553 = sand.u32 %s109, 1
        %s554 = smul.addr %s553, 64
        %s555 = scalar_lea.vmem [#allocation2], %s554
        // Predicated region
        $region33: #{tpu_custom_call.1} parent=31 // pred_check
          %p556 = pneg %p119
        $region34: #{tpu_custom_call.1} parent=31 // pred_check_branch
          %558 = sbr.rel (%p556) target = $region36
        $region35: #{tpu_custom_call.1} parent=31 // pred_region
          %s559 = smul.u32 16, %s22
          %s561 = ssub.s32 1024, 1024
          %562 = vsyncadd %s552, %s561
          %s563 = smul.addr %s21, 32
          %s564 = sadd.s32 %s559, %s563
          %s565 = smul.addr %s564, 64
          %s566 = scalar_lea.hbm %s3, %s565
          %s567 = sshll.u32 %s555, 4
          %s568 = int_to_ptr.vmem [resolvable:$true] %s567
          %573 = dma.vmem_to_hbm [thread:$0]  %s568, 1024, %s566, %s552, 64, 64, 4
        $region36: #{tpu_custom_call.1} parent=31 // pred_fallthru
          _
      $region32: #{tpu_custom_call.1} parent=5 // pred_fallthru
        _
      %p574 = scmp.le.s32.totalorder 2, %s12
      // Predicated region
      $region37: #{tpu_custom_call.1} parent=5 // pred_check
        %p575 = pneg %p574
      $region38: #{tpu_custom_call.1} parent=5 // pred_check_branch
        %577 = sbr.rel (%p575) target = $region40
      $region39: #{tpu_custom_call.1} parent=5 // pred_region
        %s578 = ssub.s32 %s12, 2
        // Predicated region
        $region41: #{tpu_custom_call.1} parent=39 // pred_check
          %p579 = pneg %p125
        $region42: #{tpu_custom_call.1} parent=39 // pred_check_branch
          %581 = sbr.rel (%p579) target = $region44
        $region43: #{tpu_custom_call.1} parent=39 // pred_region
          %s582 = sand.u32 %s110, 1
          %s583 = scalar_lea.sflag [#allocation3], %s582
          %s584 = sand.u32 %s110, 1
          %s585 = smul.addr %s584, 64
          %s586 = scalar_lea.vmem [#allocation2], %s585
          %587 = dma.done %s583, 1024
        $region44: #{tpu_custom_call.1} parent=39 // pred_fallthru
          _
      $region40: #{tpu_custom_call.1} parent=5 // pred_fallthru
        _
    $region6: #{tpu_custom_call.1} parent=1 // loop_footer
      %s16 = sadd.s32 1, %s12
    $region7: #{tpu_custom_call.1} parent=1 // loop_footer_branch
      %11 = sbr.rel target = $region3
    $region8: #{tpu_custom_call.1} parent=1 // loop_exit
      _
    %588 = vsyncpa [#allocation3], 1
    %s589 = scalar_lea.sflag [#allocation3], 1
    %590 = vsyncpa %s589, 1

</llo_original>
